<compile_context>
chip_gen: v6e
topology: v6e:2x2x1
jax: 0.10.0
libtpu: 0.0.40
codegen_flags: <defaults>
</compile_context>

<pallas_src>
import functools

import jax
import jax.numpy as jnp
from jax import lax
from jax.experimental import pallas as pl
from jax.experimental.pallas import tpu as pltpu


def _cdiv(a, b):
    return (a + b - 1) // b


def _round_up(x, m):
    return _cdiv(x, m) * m


def _focal_rows(x, t, *, alpha, gamma):
    """Per-row focal loss. x: (TN, C) f32, t: (TN, 1) int32 -> (TN, 1) f32."""
    # Numerically stable log-softmax over the class (lane) axis.
    m = jnp.max(x, axis=-1, keepdims=True)
    z = x - m
    lse = jnp.log(jnp.sum(jnp.exp(z), axis=-1, keepdims=True))

    # Gather z[target] via select (no float one-hot multiply, no 0*inf NaN).
    cls_ids = lax.broadcasted_iota(jnp.int32, x.shape, 1)          # (TN, C)
    z_t = jnp.sum(jnp.where(cls_ids == t, z, 0.0), axis=-1, keepdims=True)

    ce = lse - z_t                                                  # -log p[t]
    pt = jnp.exp(-ce)
    one_minus_pt = 1.0 - pt

    g = float(gamma)
    if g.is_integer() and 0 <= g <= 8:
        # Integer exponent: repeated VPU multiplies (EUP stays free).
        w = jnp.ones_like(one_minus_pt)
        for _ in range(int(g)):
            w = w * one_minus_pt
    else:
        w = jnp.power(one_minus_pt, g)

    return (alpha * w) * ce                                         # (TN, 1)


def _focal_reduce_kernel(logits_ref, targets_ref, out_ref, acc_ref, *,
                         alpha, gamma, n_valid, row_tile, tiles_per_split):
    """Accumulates a per-split partial sum of the focal loss."""
    s = pl.program_id(0)          # split (parallel across TensorCores on v7x)
    i = pl.program_id(1)          # row-tile index within the split (arbitrary)

    @pl.when(i == 0)
    def _init():
        acc_ref[...] = jnp.zeros_like(acc_ref)

    x = logits_ref[...].astype(jnp.float32)     # one up-front cast (v5e: f32 math)
    t = targets_ref[...]
    focal = _focal_rows(x, t, alpha=alpha, gamma=gamma)             # (TN, 1)

    # Mask rows that only exist because N was padded up to a tile multiple.
    row0 = (s * tiles_per_split + i) * row_tile
    rows = row0 + lax.broadcasted_iota(jnp.int32, focal.shape, 0)
    focal = jnp.where(rows < n_valid, focal, 0.0)

    acc_ref[...] += jnp.sum(focal, axis=0, keepdims=True)           # (1, 1)

    @pl.when(i == pl.num_programs(1) - 1)
    def _finalize():
        out_ref[...] = acc_ref[...][None]                           # (1, 1, 1)


def _focal_none_kernel(logits_ref, targets_ref, out_ref, *, alpha, gamma):
    x = logits_ref[...].astype(jnp.float32)
    t = targets_ref[...]
    out_ref[...] = _focal_rows(x, t, alpha=alpha, gamma=gamma)


def _choose_row_tile(n_rows, n_classes, requested=None):
    """Largest row tile whose double-buffered f32 working set fits scoped VMEM
    on every generation (v7x is the binding constraint)."""
    if requested is not None:
        tn = _round_up(max(int(requested), 8), 8)
    else:
        vmem_budget = 12 * 1024 * 1024                  # leave headroom < 16/32 MiB
        bytes_per_row = 2 * n_classes * 4 + 2 * 4 + 2 * 4   # 2x logits tile + targets + out
        tn = max(8, min(1024, vmem_budget // bytes_per_row))
        tn = (tn // 8) * 8
    return min(tn, _round_up(n_rows, 8))


def focal_loss(logits, targets, *, alpha=1.0, gamma=2.0, reduction="mean",
               row_tile=None):
    """Pallas TPU implementation of FocalLoss.forward.

    logits:  (N, C) float array of raw class scores.
    targets: (N,)   int class indices.
    """
    N, C = logits.shape
    alpha = float(alpha)
    gamma = float(gamma)
    targets2d = targets.astype(jnp.int32).reshape(N, 1)

    tn = _choose_row_tile(N, C, row_tile)
    n_tiles = _cdiv(N, tn)

    compiler_common = dict(vmem_limit_bytes=32 * 1024 * 1024)

    if reduction in ("mean", "sum"):
        # Split the row grid 2 ways so v7x's two TensorCores each produce a
        # partial sum; harmless (one extra grid step boundary) elsewhere.
        nsplit = 2 if n_tiles >= 2 else 1
        tiles_per_split = _cdiv(n_tiles, nsplit)
        n_pad = nsplit * tiles_per_split * tn

        logits_p = logits if n_pad == N else jnp.pad(logits, ((0, n_pad - N), (0, 0)))
        targets_p = targets2d if n_pad == N else jnp.pad(targets2d, ((0, n_pad - N), (0, 0)))

        cost = pl.CostEstimate(
            flops=8 * n_pad * C,
            transcendentals=n_pad * C + 2 * n_pad,
            bytes_accessed=4 * n_pad * C + 4 * n_pad + 4 * nsplit,
        )

        kernel = functools.partial(
            _focal_reduce_kernel, alpha=alpha, gamma=gamma,
            n_valid=N, row_tile=tn, tiles_per_split=tiles_per_split)

        partials = pl.pallas_call(
            kernel,
            out_shape=jax.ShapeDtypeStruct((nsplit, 1, 1), jnp.float32),
            grid_spec=pltpu.PrefetchScalarGridSpec(
                num_scalar_prefetch=0,
                grid=(nsplit, tiles_per_split),
                in_specs=[
                    pl.BlockSpec((tn, C), lambda s, i: (s * tiles_per_split + i, 0)),
                    pl.BlockSpec((tn, 1), lambda s, i: (s * tiles_per_split + i, 0)),
                ],
                out_specs=pl.BlockSpec((1, 1, 1), lambda s, i: (s, 0, 0)),
                scratch_shapes=[pltpu.VMEM((1, 1), jnp.float32)],
            ),
            compiler_params=pltpu.CompilerParams(
                dimension_semantics=("parallel", "arbitrary"), **compiler_common),
            cost_estimate=cost,
        )(logits_p, targets_p)

        total = jnp.sum(partials)
        if reduction == "mean":
            return total / jnp.float32(N)
        return total

    # reduction == 'none'
    n_pad = n_tiles * tn
    logits_p = logits if n_pad == N else jnp.pad(logits, ((0, n_pad - N), (0, 0)))
    targets_p = targets2d if n_pad == N else jnp.pad(targets2d, ((0, n_pad - N), (0, 0)))

    cost = pl.CostEstimate(
        flops=8 * n_pad * C,
        transcendentals=n_pad * C + 2 * n_pad,
        bytes_accessed=4 * n_pad * C + 4 * n_pad + 4 * n_pad,
    )

    out = pl.pallas_call(
        functools.partial(_focal_none_kernel, alpha=alpha, gamma=gamma),
        out_shape=jax.ShapeDtypeStruct((n_pad, 1), jnp.float32),
        grid_spec=pltpu.PrefetchScalarGridSpec(
            num_scalar_prefetch=0,
            grid=(n_tiles,),
            in_specs=[
                pl.BlockSpec((tn, C), lambda i: (i, 0)),
                pl.BlockSpec((tn, 1), lambda i: (i, 0)),
            ],
            out_specs=pl.BlockSpec((tn, 1), lambda i: (i, 0)),
        ),
        compiler_params=pltpu.CompilerParams(
            dimension_semantics=("parallel",), **compiler_common),
        cost_estimate=cost,
    )(logits_p, targets_p)

    return out[:N, 0]


def _focal_loss_ref(logits, targets, alpha=1.0, gamma=2.0, reduction="mean"):
    # Pure-JAX reference mirroring the PyTorch module.
    logp = jax.nn.log_softmax(logits.astype(jnp.float32), axis=-1)
    ce = -jnp.take_along_axis(logp, targets[:, None].astype(jnp.int32), axis=-1)[:, 0]
    pt = jnp.exp(-ce)
    fl = alpha * (1.0 - pt) ** gamma * ce
    if reduction == "mean":
        return fl.mean()
    if reduction == "sum":
        return fl.sum()
    return fl


if __name__ == "__main__":
    key = jax.random.PRNGKey(0)
    k1, k2 = jax.random.split(key)

    N, C = 20, 32  # small, and N deliberately not a tile multiple
    logits = jax.random.normal(k1, (N, C), dtype=jnp.float32)
    targets = jax.random.randint(k2, (N,), 0, C, dtype=jnp.int32)

    # Exercise: single-tile path (row_tile=None) and the multi-tile path with
    # the 2-way split + partial-tile masking (row_tile=8), for every reduction.
    for reduction in ("mean", "sum", "none"):
        for tile in (None, 8):
            got = focal_loss(logits, targets, alpha=1.0, gamma=2.0,
                             reduction=reduction, row_tile=tile)
            got = jax.block_until_ready(got)
            ref = _focal_loss_ref(logits, targets, 1.0, 2.0, reduction)
            assert jnp.allclose(got, ref, atol=1e-5, rtol=1e-5), (
                reduction, tile, got, ref)

    print("KERNEL_OK")
</pallas_src>

<mosaic_0001>
module attributes {stable_mosaic.version = 11 : i64} {
  func.func @_focal_reduce_kernel(%arg0: i32, %arg1: i32, %arg2: memref<24x32xf32, #tpu.memory_space<vmem>>, %arg3: memref<24x1xi32, #tpu.memory_space<vmem>>, %arg4: memref<1x1x1xf32, #tpu.memory_space<vmem>>, %arg5: memref<1x1xf32, #tpu.memory_space<vmem>>) attributes {dimension_semantics = [#tpu.dimension_semantics<parallel>, #tpu.dimension_semantics<arbitrary>], iteration_bounds = array<i64: 1, 1>, scalar_prefetch = 0 : i64, scratch_operands = 1 : i64, tpu.core_type = #tpu.core_type<tc>, window_params = [{transform_indices = @transform_0, window_bounds = array<i64: 24, 32>}, {transform_indices = @transform_1, window_bounds = array<i64: 24, 1>}, {transform_indices = @transform_2, window_bounds = array<i64: 1, 1, 1>}]} {
    %c0_i32 = arith.constant 0 : i32
    %0 = arith.cmpi eq, %arg1, %c0_i32 : i32
    %1 = arith.extui %0 : i1 to i32
    %c0_i32_0 = arith.constant 0 : i32
    %2 = arith.cmpi ne, %1, %c0_i32_0 : i32
    scf.if %2 {
      %cst_19 = arith.constant 0.000000e+00 : f32
      %50 = vector.broadcast %cst_19 : f32 to vector<1x1xf32>
      %c0_20 = arith.constant 0 : index
      %c0_21 = arith.constant 0 : index
      %51 = vector.load %arg5[%c0_20, %c0_21] : memref<1x1xf32, #tpu.memory_space<vmem>>, vector<1x1xf32>
      tpu.vector_store %arg5[%c0_20, %c0_21], %50 {strides = array<i32>} : memref<1x1xf32, #tpu.memory_space<vmem>>, vector<1x1xf32>,
    } else {
    }
    %c0 = arith.constant 0 : index
    %c0_1 = arith.constant 0 : index
    %3 = vector.load %arg2[%c0, %c0_1] : memref<24x32xf32, #tpu.memory_space<vmem>>, vector<24x32xf32>
    %c0_2 = arith.constant 0 : index
    %c0_3 = arith.constant 0 : index
    %4 = vector.load %arg3[%c0_2, %c0_3] : memref<24x1xi32, #tpu.memory_space<vmem>>, vector<24x1xi32>
    %cst = arith.constant dense<0xFF800000> : vector<24xf32>
    %5 = vector.multi_reduction <maximumf>, %3, %cst [1] : vector<24x32xf32> to vector<24xf32>
    %6 = vector.shape_cast %5 : vector<24xf32> to vector<24x1xf32>
    %7 = vector.broadcast %6 : vector<24x1xf32> to vector<24x32xf32>
    %8 = arith.subf %3, %7 : vector<24x32xf32>
    %9 = math.exp %8 : vector<24x32xf32>
    %cst_4 = arith.constant dense<0.000000e+00> : vector<24xf32>
    %10 = vector.multi_reduction <add>, %9, %cst_4 [1] : vector<24x32xf32> to vector<24xf32>
    %11 = vector.shape_cast %10 : vector<24xf32> to vector<24x1xf32>
    %12 = math.log %11 : vector<24x1xf32>
    %13 = tpu.iota {dimensions = array<i32: 1>} : vector<24x32xi32>
    %14 = vector.broadcast %4 : vector<24x1xi32> to vector<24x32xi32>
    %15 = arith.cmpi eq, %13, %14 : vector<24x32xi32>
    %cst_5 = arith.constant 0.000000e+00 : f32
    %16 = vector.broadcast %cst_5 : f32 to vector<24x32xf32>
    %17 = arith.select %15, %8, %16 : vector<24x32xi1>, vector<24x32xf32>
    %cst_6 = arith.constant dense<0.000000e+00> : vector<24xf32>
    %18 = vector.multi_reduction <add>, %17, %cst_6 [1] : vector<24x32xf32> to vector<24xf32>
    %19 = vector.shape_cast %18 : vector<24xf32> to vector<24x1xf32>
    %20 = arith.subf %12, %19 : vector<24x1xf32>
    %cst_7 = arith.constant 0.000000e+00 : f32
    %21 = vector.broadcast %cst_7 : f32 to vector<24x1xf32>
    %22 = arith.subf %21, %20 : vector<24x1xf32>
    %23 = math.exp %22 : vector<24x1xf32>
    %cst_8 = arith.constant 1.000000e+00 : f32
    %24 = vector.broadcast %cst_8 : f32 to vector<24x1xf32>
    %25 = arith.subf %24, %23 : vector<24x1xf32>
    %cst_9 = arith.constant 1.000000e+00 : f32
    %26 = vector.broadcast %cst_9 : f32 to vector<24x1xf32>
    %27 = arith.mulf %26, %25 : vector<24x1xf32>
    %28 = arith.mulf %27, %25 : vector<24x1xf32>
    %cst_10 = arith.constant 1.000000e+00 : f32
    %29 = vector.broadcast %cst_10 : f32 to vector<24x1xf32>
    %30 = arith.mulf %29, %28 : vector<24x1xf32>
    %31 = arith.mulf %30, %20 : vector<24x1xf32>
    %c1_i32 = arith.constant 1 : i32
    %32 = arith.muli %arg0, %c1_i32 : i32
    %33 = arith.addi %32, %arg1 : i32
    %c24_i32 = arith.constant 24 : i32
    %34 = arith.muli %33, %c24_i32 : i32
    %35 = tpu.iota {dimensions = array<i32: 0>} : vector<24x1xi32>
    %36 = vector.broadcast %34 : i32 to vector<24x1xi32>
    %37 = arith.addi %36, %35 : vector<24x1xi32>
    %c20_i32 = arith.constant 20 : i32
    %38 = vector.broadcast %c20_i32 : i32 to vector<24x1xi32>
    %39 = arith.cmpi slt, %37, %38 : vector<24x1xi32>
    %cst_11 = arith.constant 0.000000e+00 : f32
    %40 = vector.broadcast %cst_11 : f32 to vector<24x1xf32>
    %41 = arith.select %39, %31, %40 : vector<24x1xi1>, vector<24x1xf32>
    %c0_12 = arith.constant 0 : index
    %c0_13 = arith.constant 0 : index
    %42 = vector.load %arg5[%c0_12, %c0_13] : memref<1x1xf32, #tpu.memory_space<vmem>>, vector<1x1xf32>
    %cst_14 = arith.constant dense<0.000000e+00> : vector<1xf32>
    %43 = vector.multi_reduction <add>, %41, %cst_14 [0] : vector<24x1xf32> to vector<1xf32>
    %44 = vector.shape_cast %43 : vector<1xf32> to vector<1x1xf32>
    %45 = arith.addf %42, %44 : vector<1x1xf32>
    %c0_15 = arith.constant 0 : index
    %c0_16 = arith.constant 0 : index
    %46 = vector.load %arg5[%c0_15, %c0_16] : memref<1x1xf32, #tpu.memory_space<vmem>>, vector<1x1xf32>
    tpu.vector_store %arg5[%c0_15, %c0_16], %45 {strides = array<i32>} : memref<1x1xf32, #tpu.memory_space<vmem>>, vector<1x1xf32>,
    %c0_i32_17 = arith.constant 0 : i32
    %47 = arith.cmpi eq, %arg1, %c0_i32_17 : i32
    %48 = arith.extui %47 : i1 to i32
    %c0_i32_18 = arith.constant 0 : i32
    %49 = arith.cmpi ne, %48, %c0_i32_18 : i32
    scf.if %49 {
      %c0_19 = arith.constant 0 : index
      %c0_20 = arith.constant 0 : index
      %50 = vector.load %arg5[%c0_19, %c0_20] : memref<1x1xf32, #tpu.memory_space<vmem>>, vector<1x1xf32>
      %51 = vector.shape_cast %50 : vector<1x1xf32> to vector<1x1x1xf32>
      %c0_21 = arith.constant 0 : index
      %c0_22 = arith.constant 0 : index
      %c0_23 = arith.constant 0 : index
      %52 = vector.load %arg4[%c0_21, %c0_22, %c0_23] : memref<1x1x1xf32, #tpu.memory_space<vmem>>, vector<1x1x1xf32>
      tpu.vector_store %arg4[%c0_21, %c0_22, %c0_23], %51 {strides = array<i32>} : memref<1x1x1xf32, #tpu.memory_space<vmem>>, vector<1x1x1xf32>,
    } else {
    }
    return
  }
  func.func @transform_0(%arg0: i32, %arg1: i32) -> (i32, i32) {
    %c1_i32 = arith.constant 1 : i32
    %0 = arith.muli %arg0, %c1_i32 : i32
    %1 = arith.addi %0, %arg1 : i32
    %c0_i32 = arith.constant 0 : i32
    %c0_i32_0 = arith.constant 0 : i32
    return %1, %c0_i32 : i32, i32
  }
  func.func @transform_1(%arg0: i32, %arg1: i32) -> (i32, i32) {
    %c1_i32 = arith.constant 1 : i32
    %0 = arith.muli %arg0, %c1_i32 : i32
    %1 = arith.addi %0, %arg1 : i32
    %c0_i32 = arith.constant 0 : i32
    %c0_i32_0 = arith.constant 0 : i32
    return %1, %c0_i32 : i32, i32
  }
  func.func @transform_2(%arg0: i32, %arg1: i32) -> (i32, i32, i32) {
    %c0_i32 = arith.constant 0 : i32
    %c0_i32_0 = arith.constant 0 : i32
    %c0_i32_1 = arith.constant 0 : i32
    return %arg0, %c0_i32, %c0_i32_0 : i32, i32, i32
  }
}

</mosaic_0001>

<llo_original>
// kernel: tpu_custom_call.1
$region0: #{tpu_custom_call.1}
  #allocation0 [shape = 'u32[]', space=smem, size = 0x4, offset = 0x4, fixed_abs, tag = 'smem constant byte address 0x4 - core index']
  #allocation1 [shape = 'u32[144,128]{1,0:T(1,128)}', space=vmem, size = 0x12000, scoped, tag = 'internal scratch']
  #allocation2 [shape = 'f32[1,1]{1,0:T(1,128)}', space=vmem, size = 0x200, scoped, tag = 'scratch operand']
  %s0 = inlined_call_operand.vmem [shape: f32[24,32], index: 0, kind: input, shape index: {}]
  %s1 = inlined_call_operand.vmem [shape: s32[24,1], index: 1, kind: input, shape index: {}]
  %s2 = inlined_call_operand.hbm [shape: f32[1,1,1], index: 2, kind: output, shape index: {}]
  %s3 = sld [smem:[#allocation0]]
  $region26: #{tpu_custom_call.1} parent=0
    _
  %s5 = ssub.s32 1, %s3
  %s6 = scalar_select 0, %s5, %s3
  $region1: #{tpu_custom_call.1} parent=0
    #allocation3 [shape = 'u8[512]{0}', space=vmem, size = 0x400, scoped, tag = 'output window, operand 0, single buffered']
    #allocation4 [shape = 's32[1]{0}', space=sflag, size = 0x4, scoped, tag = 'scoped memory for tpu_custom_call.1']
    %7 = vsyncpa [#allocation4], 0
    // Predicated region
    $region2: #{tpu_custom_call.1} parent=1 // pred_check
      _
    $region3: #{tpu_custom_call.1} parent=1 // pred_check_branch
      %9 = sbr.rel (0) target = $region5
    $region4: #{tpu_custom_call.1} parent=1 // pred_region
      %s10 = sadd.s32 0, 0
      %s11 = smul.u32 3, %s10
      %p12 = scmp.lt.s32.totalorder %s11, 2
      %s13 = scalar_select %p12, %s11, 2
      %s14 = smul.addr %s13, 8
      %s15 = scalar_lea.vmem %s0, %s14
      %s16 = sadd.s32 0, 0
      %s17 = smul.u32 3, %s16
    $region5: #{tpu_custom_call.1} parent=1 // pred_fallthru
      _
    // Predicated region
    $region6: #{tpu_custom_call.1} parent=1 // pred_check
      _
    $region7: #{tpu_custom_call.1} parent=1 // pred_check_branch
      %19 = sbr.rel (0) target = $region9
    $region8: #{tpu_custom_call.1} parent=1 // pred_region
      %s20 = sadd.s32 0, 0
      %s21 = smul.u32 3, %s20
      %p22 = scmp.lt.s32.totalorder %s21, 2
      %s23 = scalar_select %p22, %s21, 2
      %s24 = smul.addr %s23, 8
      %s25 = scalar_lea.vmem %s1, %s24
      %s26 = sadd.s32 0, 0
      %s27 = smul.u32 3, %s26
    $region9: #{tpu_custom_call.1} parent=1 // pred_fallthru
      _
    %s28 = sadd.s32 0, 0
    %s29 = smul.u32 3, %s28
    %p30 = scmp.lt.s32.totalorder %s29, 2
    %s31 = scalar_select %p30, %s29, 2
    %s32 = smul.addr %s31, 8
    %s33 = scalar_lea.vmem %s0, %s32
    %s34 = sadd.s32 0, 0
    %s35 = smul.u32 3, %s34
    %p36 = scmp.lt.s32.totalorder %s35, 2
    %s37 = scalar_select %p36, %s35, 2
    %s38 = smul.addr %s37, 8
    %s39 = scalar_lea.vmem %s1, %s38
    %s40 = sadd.s32 0, 0
    %s41 = smul.u32 3, %s40
    %p42 = scmp.lt.s32.totalorder %s41, 2
    %s43 = scalar_select %p42, %s41, 2
    %s44 = smul.addr %s43, 8
    %s45 = scalar_lea.vmem %s0, %s44
    %s46 = sadd.s32 0, 0
    %s47 = smul.u32 3, %s46
    %s48 = sadd.s32 0, 0
    %s49 = smul.u32 3, %s48
    %p50 = scmp.lt.s32.totalorder %s49, 2
    %s51 = scalar_select %p50, %s49, 2
    %s52 = smul.addr %s51, 8
    %s53 = scalar_lea.vmem %s1, %s52
    %s54 = sadd.s32 0, 0
    %s55 = smul.u32 3, %s54
    %p56 = scmp.eq.s32.totalorder 0, 0
    // Predicated region
    $region10: #{tpu_custom_call.1} parent=1 // pred_check
      %p57 = pneg %p56
    $region11: #{tpu_custom_call.1} parent=1 // pred_check_branch
      %59 = sbr.rel (%p57) target = $region13
    $region12: #{tpu_custom_call.1} parent=1 // pred_region
      %vm60 = vcmask 0
      %61 = vst.msk [vmem:[#allocation2] sm:$0x1] %vm60, 0.0
    $region13: #{tpu_custom_call.1} parent=1 // pred_fallthru
      _
    %v62 = vld [vmem:[%s45] sm:$0xff]
    %v63 = vld [vmem:[%s45 + $0x8] sm:$0xff]
    %v64 = vld [vmem:[%s45 + $0x10] sm:$0xff]
    %v65 = vld [vmem:[%s53] sm:$0xff]
    %v66 = vld [vmem:[%s53 + $0x8] sm:$0xff]
    %v67 = vld [vmem:[%s53 + $0x10] sm:$0xff]
    %vm68 = vcmask 261120
    %v69 = vsel %vm68, %v62, -inf
    %70 = vmax.xlane.f32.xlu0 %v69
    %v71 = vpop.xlane.xlu0 %70
    %v72 = vsel %vm68, %v63, -inf
    %73 = vmax.xlane.f32.xlu0 %v72
    %v74 = vpop.xlane.xlu0 %73
    %v75 = vsel %vm68, %v64, -inf
    %76 = vmax.xlane.f32.xlu0 %v75
    %v77 = vpop.xlane.xlu0 %76
    %v78 = vsub.f32 %v62, %v71
    %v79 = vsub.f32 %v63, %v74
    %v80 = vsub.f32 %v64, %v77
    %v81 = vmul.f32 %v78, 1.442695
    %v82 = vpow.pop %v81
    %v83 = vmul.f32 %v79, 1.442695
    %v84 = vpow.pop %v83
    %v85 = vmul.f32 %v80, 1.442695
    %v86 = vpow.pop %v85
    %v87 = vsel %vm68, %v82, 0.0
    %88 = vadd.xlane.f32.xlu0 %v87
    %v89 = vpop.xlane.xlu0 %88
    %v90 = vsel %vm68, %v84, 0.0
    %91 = vadd.xlane.f32.xlu0 %v90
    %v92 = vpop.xlane.xlu0 %91
    %v93 = vsel %vm68, %v86, 0.0
    %94 = vadd.xlane.f32.xlu0 %v93
    %v95 = vpop.xlane.xlu0 %94
    %v96 = vlog2.pop %v89
    %v97 = vmul.f32 %v96, 0.6931472
    %v98 = vlog2.pop %v92
    %v99 = vmul.f32 %v98, 0.6931472
    %v100 = vlog2.pop %v95
    %v101 = vmul.f32 %v100, 0.6931472
    %v102 = vlaneseq
    %v103 = vand.u32 %v102, 127
    %104 = vset.pattern.permute.xlu0 0
    %105 = vperm.xlu0 %104, %v65
    %v106 = vpop.permute.xlu0 %105
    %107 = vset.pattern.permute.xlu0 0
    %108 = vperm.xlu0 %107, %v66
    %v109 = vpop.permute.xlu0 %108
    %110 = vset.pattern.permute.xlu0 0
    %111 = vperm.xlu0 %110, %v67
    %v112 = vpop.permute.xlu0 %111
    %vm113 = vcmp.eq.s32.totalorder %v103, %v106
    %vm114 = vcmp.eq.s32.totalorder %v103, %v109
    %vm115 = vcmp.eq.s32.totalorder %v103, %v112
    %v116 = vsel %vm113, %v78, 0.0
    %v117 = vsel %vm114, %v79, 0.0
    %v118 = vsel %vm115, %v80, 0.0
    %v119 = vsel %vm68, %v116, 0.0
    %120 = vadd.xlane.f32.xlu0 %v119
    %v121 = vpop.xlane.xlu0 %120
    %v122 = vsel %vm68, %v117, 0.0
    %123 = vadd.xlane.f32.xlu0 %v122
    %v124 = vpop.xlane.xlu0 %123
    %v125 = vsel %vm68, %v118, 0.0
    %126 = vadd.xlane.f32.xlu0 %v125
    %v127 = vpop.xlane.xlu0 %126
    %v128 = vsub.f32 %v97, %v121
    %v129 = vsub.f32 %v99, %v124
    %v130 = vsub.f32 %v101, %v127
    %v131 = vsub.f32 0.0, %v128
    %v132 = vsub.f32 0.0, %v129
    %v133 = vsub.f32 0.0, %v130
    %v134 = vmul.f32 %v131, 1.442695
    %v135 = vpow.pop %v134
    %v136 = vmul.f32 %v132, 1.442695
    %v137 = vpow.pop %v136
    %v138 = vmul.f32 %v133, 1.442695
    %v139 = vpow.pop %v138
    %v140 = vsub.f32 1.0, %v135
    %v141 = vsub.f32 1.0, %v137
    %v142 = vsub.f32 1.0, %v139
    %v143 = vmul.f32 %v140, %v140
    %v144 = vmul.f32 %v141, %v141
    %v145 = vmul.f32 %v142, %v142
    %v146 = vmul.f32 %v143, %v128
    %v147 = vmul.f32 %v144, %v129
    %v148 = vmul.f32 %v145, %v130
    %s149 = sadd.s32 0, 0
    %s150 = smul.u32 %s149, 24
    %v151 = vlaneseq
    %v152 = vshrl.u32 %v151, 7
    %v153 = vadd.s32 %v152, 8
    %v154 = vadd.s32 %v152, 16
    %v155 = vstv %s150
    %v156 = vadd.s32 %v155, %v152
    %v157 = vadd.s32 %v155, %v153
    %v158 = vadd.s32 %v155, %v154
    %vm159 = vcmp.lt.s32.totalorder %v156, 20
    %vm160 = vcmp.lt.s32.totalorder %v157, 20
    %vm161 = vcmp.lt.s32.totalorder %v158, 20
    %v162 = vsel %vm159, %v146, 0.0
    %v163 = vsel %vm160, %v147, 0.0
    %v164 = vsel %vm161, %v148, 0.0
    %v165 = vld [vmem:[#allocation2] sm:$0x1]
    %v166 = vadd.f32 %v162, %v163
    %v167 = vadd.f32 %v166, %v164
    %v168 = vrot.slane %v167, 4
    %v169 = vadd.f32 %v167, %v168
    %v170 = vrot.slane %v169, 2
    %v171 = vadd.f32 %v169, %v170
    %v172 = vrot.slane %v171, 1
    %v173 = vadd.f32 %v171, %v172
    %v174 = vadd.f32 %v165, %v173
    %vm175 = vcmask 0
    %176 = vst.msk [vmem:[#allocation2] sm:$0x1] %vm175, %v174
    // Predicated region
    $region14: #{tpu_custom_call.1} parent=1 // pred_check
      %p177 = pneg %p56
    $region15: #{tpu_custom_call.1} parent=1 // pred_check_branch
      %179 = sbr.rel (%p177) target = $region17
    $region16: #{tpu_custom_call.1} parent=1 // pred_region
      %v180 = vld [vmem:[#allocation2] sm:$0x1]
      %181 = vst.msk [vmem:[#allocation3] sm:$0x1] %vm175, %v180
    $region17: #{tpu_custom_call.1} parent=1 // pred_fallthru
      _
    // Predicated region
    $region18: #{tpu_custom_call.1} parent=1 // pred_check
      _
    $region19: #{tpu_custom_call.1} parent=1 // pred_check_branch
      %183 = sbr.rel (0) target = $region21
    $region20: #{tpu_custom_call.1} parent=1 // pred_region
      %s185 = ssub.s32 16, 16
      %186 = vsyncadd [#allocation4], %s185
      %s188 = sshll.u32 [#allocation3], 4
      %s189 = int_to_ptr.vmem [resolvable:$true] %s188
      %191 = dma.vmem_to_hbm [thread:$0]  %s189, 16, %s2, [#allocation4]
    $region21: #{tpu_custom_call.1} parent=1 // pred_fallthru
      _
    // Predicated region
    $region22: #{tpu_custom_call.1} parent=1 // pred_check
      _
    $region23: #{tpu_custom_call.1} parent=1 // pred_check_branch
      %193 = sbr.rel (0) target = $region25
    $region24: #{tpu_custom_call.1} parent=1 // pred_region
      %194 = dma.done [#allocation4], 16
    $region25: #{tpu_custom_call.1} parent=1 // pred_fallthru
      _
    %195 = vsyncpa [#allocation4], 1

</llo_original>
